<compile_context>
chip_gen: v6e
topology: v6e:2x2x1
jax: 0.10.0
libtpu: 0.0.40
codegen_flags: <defaults>
</compile_context>

<pallas_src>
import jax
import jax.numpy as jnp
from jax.experimental import pallas as pl
from jax.experimental.pallas import tpu as pltpu


def mlp_kernel(x_ref, w1_ref, b1_ref, w2_ref, b2_ref, w3_ref, b3_ref, o_ref):
    # x_ref: (4, TB)   w1: (10, 4)  b1: (10, 1)
    # h1:    (10, TB)  w2: (8, 10)  b2: (8, 1)
    # h2:    (8, TB)   w3: (3, 8)   b3: (3, 1)
    # out:   (3, TB)
    x = x_ref[...]
    h1 = jnp.dot(w1_ref[...], x, preferred_element_type=jnp.float32)
    h1 = jnp.maximum(h1 + b1_ref[...], 0.0)
    h2 = jnp.dot(w2_ref[...], h1, preferred_element_type=jnp.float32)
    h2 = jnp.maximum(h2 + b2_ref[...], 0.0)
    out = jnp.dot(w3_ref[...], h2, preferred_element_type=jnp.float32)
    o_ref[...] = (out + b3_ref[...]).astype(o_ref.dtype)


def _round_up(v, m):
    return ((v + m - 1) // m) * m


def net_forward_fm(xt, params, tb=65536):
    """Feature-major forward.

    xt: (4, B) float32 (batch on the lane axis).
    params: PyTorch nn.Linear layout: W (out, in), b (out, 1).
    Returns (3, B) float32. No wrapper-side transpose / pad / slice HBM passes.
    """
    w1, b1, w2, b2, w3, b3 = params
    in_f, B = xt.shape
    out_f = w3.shape[0]

    if B <= 256:
        # Tiny batch: a single block equal to the full array (no 128-lane
        # divisibility requirement when block == array extent).
        TB = B
    else:
        # Lane-tile width: big enough to amortize per-step overhead, small
        # enough to (a) fit the ~128*TB-byte VMEM budget and (b) leave >=2
        # grid steps so v7x's two TensorCores can split the parallel axis.
        TB = min(int(tb), _round_up(pl.cdiv(B, 2), 128))
    grid = (pl.cdiv(B, TB),)  # ragged last block handled by Pallas (masked store)

    x_spec = pl.BlockSpec((in_f, TB), lambda i: (0, i))
    out_spec = pl.BlockSpec((out_f, TB), lambda i: (0, i))
    # Weights/biases: same (0, 0) block every grid step -> fetched once, VMEM-resident.
    resident = lambda a: pl.BlockSpec(a.shape, lambda i: (0, 0))

    flops = 2 * B * (4 * 10 + 10 * 8 + 8 * 3)
    param_bytes = sum(int(p.size) * p.dtype.itemsize for p in params)
    bytes_accessed = B * (in_f + out_f) * 4 + param_bytes

    return pl.pallas_call(
        mlp_kernel,
        out_shape=jax.ShapeDtypeStruct((out_f, B), jnp.float32),
        grid=grid,
        in_specs=[
            x_spec,
            resident(w1), resident(b1),
            resident(w2), resident(b2),
            resident(w3), resident(b3),
        ],
        out_specs=out_spec,
        compiler_params=pltpu.CompilerParams(
            dimension_semantics=("parallel",),
        ),
        cost_estimate=pl.CostEstimate(
            flops=flops, transcendentals=0, bytes_accessed=bytes_accessed),
    )(xt, w1, b1, w2, b2, w3, b3)


def net_forward(x, params, tb=65536):
    """Batch-major compat interface: x (B, 4) -> (B, 3), matching the PyTorch module.

    Note: the two transposes here are extra HBM passes around a memory-bound
    kernel; prefer `net_forward_fm` with feature-major data when the producer /
    consumer can supply / accept it (or let XLA fuse the transposes upstream).
    """
    return net_forward_fm(x.T, params, tb=tb).T


def init_params(key):
    """PyTorch nn.Linear-style init/shapes: fc1(4->10), fc2(10->8), fc3(8->3).

    W is (out_features, in_features), b is (out_features, 1).
    """
    ks = jax.random.split(key, 6)

    def linear(kw, kb, fan_in, fan_out):
        bound = 1.0 / jnp.sqrt(fan_in)
        w = jax.random.uniform(kw, (fan_out, fan_in), jnp.float32, -bound, bound)
        b = jax.random.uniform(kb, (fan_out, 1), jnp.float32, -bound, bound)
        return w, b

    w1, b1 = linear(ks[0], ks[1], 4, 10)
    w2, b2 = linear(ks[2], ks[3], 10, 8)
    w3, b3 = linear(ks[4], ks[5], 8, 3)
    return (w1, b1, w2, b2, w3, b3)


def reference_forward(x, params):
    """Pure-JAX reference on batch-major x: (B, 4) -> (B, 3)."""
    w1, b1, w2, b2, w3, b3 = params
    h = jnp.maximum(x @ w1.T + b1.T, 0.0)
    h = jnp.maximum(h @ w2.T + b2.T, 0.0)
    return h @ w3.T + b3.T


if __name__ == "__main__":
    key = jax.random.PRNGKey(0)
    k_x, k_x2, k_p = jax.random.split(key, 3)
    params = init_params(k_p)

    # Small iris-like batch in feature-major layout (4 input features):
    # single full-array block, no transposes anywhere.
    B = 8
    xt = jax.random.normal(k_x, (4, B), jnp.float32)
    out_fm = net_forward_fm(xt, params)
    jax.block_until_ready(out_fm)
    ref = reference_forward(xt.T, params)
    assert out_fm.shape == (3, B)
    assert jnp.allclose(out_fm.T, ref, atol=1e-5, rtol=1e-5), \
        "mismatch vs reference (feature-major, small B)"

    # Larger batch through the batch-major compat wrapper: 2 grid steps of
    # 256 lanes with a ragged (masked) last block -- no jnp.pad, no slicing.
    B2 = 300
    x2 = jax.random.normal(k_x2, (B2, 4), jnp.float32)
    out2 = net_forward(x2, params)
    jax.block_until_ready(out2)
    ref2 = reference_forward(x2, params)
    assert out2.shape == (B2, 3)
    assert jnp.allclose(out2, ref2, atol=1e-5, rtol=1e-5), \
        "mismatch vs reference (gridded, ragged last block)"

    print("KERNEL_OK")
</pallas_src>

<mosaic_0001>
module attributes {stable_mosaic.version = 11 : i64} {
  func.func @mlp_kernel(%arg0: i32, %arg1: memref<4x8xf32, #tpu.memory_space<vmem>>, %arg2: memref<10x4xf32, #tpu.memory_space<vmem>>, %arg3: memref<10x1xf32, #tpu.memory_space<vmem>>, %arg4: memref<8x10xf32, #tpu.memory_space<vmem>>, %arg5: memref<8x1xf32, #tpu.memory_space<vmem>>, %arg6: memref<3x8xf32, #tpu.memory_space<vmem>>, %arg7: memref<3x1xf32, #tpu.memory_space<vmem>>, %arg8: memref<3x8xf32, #tpu.memory_space<vmem>>) attributes {dimension_semantics = [#tpu.dimension_semantics<parallel>], iteration_bounds = array<i64: 1>, scalar_prefetch = 0 : i64, scratch_operands = 0 : i64, tpu.core_type = #tpu.core_type<tc>, window_params = [{transform_indices = @transform_0, window_bounds = array<i64: 4, 8>}, {pipeline_mode = #tpu.pipeline_mode<synchronous>, transform_indices = @transform_1, window_bounds = array<i64: 10, 4>}, {pipeline_mode = #tpu.pipeline_mode<synchronous>, transform_indices = @transform_2, window_bounds = array<i64: 10, 1>}, {pipeline_mode = #tpu.pipeline_mode<synchronous>, transform_indices = @transform_3, window_bounds = array<i64: 8, 10>}, {pipeline_mode = #tpu.pipeline_mode<synchronous>, transform_indices = @transform_4, window_bounds = array<i64: 8, 1>}, {pipeline_mode = #tpu.pipeline_mode<synchronous>, transform_indices = @transform_5, window_bounds = array<i64: 3, 8>}, {pipeline_mode = #tpu.pipeline_mode<synchronous>, transform_indices = @transform_6, window_bounds = array<i64: 3, 1>}, {transform_indices = @transform_7, window_bounds = array<i64: 3, 8>}]} {
    %c0 = arith.constant 0 : index
    %c0_0 = arith.constant 0 : index
    %0 = vector.load %arg1[%c0, %c0_0] : memref<4x8xf32, #tpu.memory_space<vmem>>, vector<4x8xf32>
    %c0_1 = arith.constant 0 : index
    %c0_2 = arith.constant 0 : index
    %1 = vector.load %arg2[%c0_1, %c0_2] : memref<10x4xf32, #tpu.memory_space<vmem>>, vector<10x4xf32>
    %cst = arith.constant dense<0.000000e+00> : vector<10x8xf32>
    %2 = tpu.matmul %1, %0, %cst {dimension_numbers = #tpu.dot_dimension_numbers<[1], [0], [0], [1], [0, 0, 1, 1], [], []>} : vector<10x4xf32>, vector<4x8xf32>, vector<10x8xf32> -> vector<10x8xf32>
    %c0_3 = arith.constant 0 : index
    %c0_4 = arith.constant 0 : index
    %3 = vector.load %arg3[%c0_3, %c0_4] : memref<10x1xf32, #tpu.memory_space<vmem>>, vector<10x1xf32>
    %4 = vector.broadcast %3 : vector<10x1xf32> to vector<10x8xf32>
    %5 = arith.addf %2, %4 : vector<10x8xf32>
    %cst_5 = arith.constant 0.000000e+00 : f32
    %6 = vector.broadcast %cst_5 : f32 to vector<10x8xf32>
    %7 = arith.maximumf %5, %6 : vector<10x8xf32>
    %c0_6 = arith.constant 0 : index
    %c0_7 = arith.constant 0 : index
    %8 = vector.load %arg4[%c0_6, %c0_7] : memref<8x10xf32, #tpu.memory_space<vmem>>, vector<8x10xf32>
    %cst_8 = arith.constant dense<0.000000e+00> : vector<8x8xf32>
    %9 = tpu.matmul %8, %7, %cst_8 {dimension_numbers = #tpu.dot_dimension_numbers<[1], [0], [0], [1], [0, 0, 1, 1], [], []>} : vector<8x10xf32>, vector<10x8xf32>, vector<8x8xf32> -> vector<8x8xf32>
    %c0_9 = arith.constant 0 : index
    %c0_10 = arith.constant 0 : index
    %10 = vector.load %arg5[%c0_9, %c0_10] : memref<8x1xf32, #tpu.memory_space<vmem>>, vector<8x1xf32>
    %11 = vector.broadcast %10 : vector<8x1xf32> to vector<8x8xf32>
    %12 = arith.addf %9, %11 : vector<8x8xf32>
    %cst_11 = arith.constant 0.000000e+00 : f32
    %13 = vector.broadcast %cst_11 : f32 to vector<8x8xf32>
    %14 = arith.maximumf %12, %13 : vector<8x8xf32>
    %c0_12 = arith.constant 0 : index
    %c0_13 = arith.constant 0 : index
    %15 = vector.load %arg6[%c0_12, %c0_13] : memref<3x8xf32, #tpu.memory_space<vmem>>, vector<3x8xf32>
    %cst_14 = arith.constant dense<0.000000e+00> : vector<3x8xf32>
    %16 = tpu.matmul %15, %14, %cst_14 {dimension_numbers = #tpu.dot_dimension_numbers<[1], [0], [0], [1], [0, 0, 1, 1], [], []>} : vector<3x8xf32>, vector<8x8xf32>, vector<3x8xf32> -> vector<3x8xf32>
    %c0_15 = arith.constant 0 : index
    %c0_16 = arith.constant 0 : index
    %17 = vector.load %arg7[%c0_15, %c0_16] : memref<3x1xf32, #tpu.memory_space<vmem>>, vector<3x1xf32>
    %18 = vector.broadcast %17 : vector<3x1xf32> to vector<3x8xf32>
    %19 = arith.addf %16, %18 : vector<3x8xf32>
    %c0_17 = arith.constant 0 : index
    %c0_18 = arith.constant 0 : index
    %20 = vector.load %arg8[%c0_17, %c0_18] : memref<3x8xf32, #tpu.memory_space<vmem>>, vector<3x8xf32>
    tpu.vector_store %arg8[%c0_17, %c0_18], %19 {strides = array<i32>} : memref<3x8xf32, #tpu.memory_space<vmem>>, vector<3x8xf32>,
    return
  }
  func.func @transform_0(%arg0: i32) -> (i32, i32) {
    %c0_i32 = arith.constant 0 : i32
    %c0_i32_0 = arith.constant 0 : i32
    return %c0_i32, %arg0 : i32, i32
  }
  func.func @transform_1(%arg0: i32) -> (i32, i32) {
    %c0_i32 = arith.constant 0 : i32
    %c0_i32_0 = arith.constant 0 : i32
    %c0_i32_1 = arith.constant 0 : i32
    return %c0_i32, %c0_i32_0 : i32, i32
  }
  func.func @transform_2(%arg0: i32) -> (i32, i32) {
    %c0_i32 = arith.constant 0 : i32
    %c0_i32_0 = arith.constant 0 : i32
    %c0_i32_1 = arith.constant 0 : i32
    return %c0_i32, %c0_i32_0 : i32, i32
  }
  func.func @transform_3(%arg0: i32) -> (i32, i32) {
    %c0_i32 = arith.constant 0 : i32
    %c0_i32_0 = arith.constant 0 : i32
    %c0_i32_1 = arith.constant 0 : i32
    return %c0_i32, %c0_i32_0 : i32, i32
  }
  func.func @transform_4(%arg0: i32) -> (i32, i32) {
    %c0_i32 = arith.constant 0 : i32
    %c0_i32_0 = arith.constant 0 : i32
    %c0_i32_1 = arith.constant 0 : i32
    return %c0_i32, %c0_i32_0 : i32, i32
  }
  func.func @transform_5(%arg0: i32) -> (i32, i32) {
    %c0_i32 = arith.constant 0 : i32
    %c0_i32_0 = arith.constant 0 : i32
    %c0_i32_1 = arith.constant 0 : i32
    return %c0_i32, %c0_i32_0 : i32, i32
  }
  func.func @transform_6(%arg0: i32) -> (i32, i32) {
    %c0_i32 = arith.constant 0 : i32
    %c0_i32_0 = arith.constant 0 : i32
    %c0_i32_1 = arith.constant 0 : i32
    return %c0_i32, %c0_i32_0 : i32, i32
  }
  func.func @transform_7(%arg0: i32) -> (i32, i32) {
    %c0_i32 = arith.constant 0 : i32
    %c0_i32_0 = arith.constant 0 : i32
    return %c0_i32, %arg0 : i32, i32
  }
}

</mosaic_0001>

<llo_original>
// kernel: tpu_custom_call.1
$region0: #{tpu_custom_call.1}
  #allocation0 [shape = 'u32[]', space=smem, size = 0x4, offset = 0x4, fixed_abs, tag = 'smem constant byte address 0x4 - core index']
  #allocation1 [shape = 'u32[144,128]{1,0:T(1,128)}', space=vmem, size = 0x12000, scoped, tag = 'internal scratch']
  %s0 = inlined_call_operand.vmem [shape: f32[4,8], index: 0, kind: input, shape index: {}]
  %s1 = inlined_call_operand.vmem [shape: f32[10,4], index: 1, kind: input, shape index: {}]
  %s2 = inlined_call_operand.vmem [shape: f32[10,1], index: 2, kind: input, shape index: {}]
  %s3 = inlined_call_operand.vmem [shape: f32[8,10], index: 3, kind: input, shape index: {}]
  %s4 = inlined_call_operand.vmem [shape: f32[8,1], index: 4, kind: input, shape index: {}]
  %s5 = inlined_call_operand.vmem [shape: f32[3,8], index: 5, kind: input, shape index: {}]
  %s6 = inlined_call_operand.vmem [shape: f32[3,1], index: 6, kind: input, shape index: {}]
  %s7 = inlined_call_operand.hbm [shape: f32[3,8], index: 7, kind: output, shape index: {}]
  %s8 = sld [smem:[#allocation0]]
  $region38: #{tpu_custom_call.1} parent=0
    _
  %s10 = ssub.s32 1, %s8
  %s11 = scalar_select 0, %s10, %s8
  $region1: #{tpu_custom_call.1} parent=0
    #allocation2 [shape = 'u8[2048]{0}', space=vmem, size = 0x800, scoped, tag = 'output window, operand 0, single buffered']
    #allocation3 [shape = 's32[1]{0}', space=sflag, size = 0x4, scoped, tag = 'scoped memory for tpu_custom_call.1']
    %12 = vsyncpa [#allocation3], 0
    // Predicated region
    $region2: #{tpu_custom_call.1} parent=1 // pred_check
      _
    $region3: #{tpu_custom_call.1} parent=1 // pred_check_branch
      %14 = sbr.rel (0) target = $region5
    $region4: #{tpu_custom_call.1} parent=1 // pred_region
      _
    $region5: #{tpu_custom_call.1} parent=1 // pred_fallthru
      _
    // Predicated region
    $region6: #{tpu_custom_call.1} parent=1 // pred_check
      _
    $region7: #{tpu_custom_call.1} parent=1 // pred_check_branch
      %16 = sbr.rel (0) target = $region9
    $region8: #{tpu_custom_call.1} parent=1 // pred_region
      _
    $region9: #{tpu_custom_call.1} parent=1 // pred_fallthru
      _
    // Predicated region
    $region10: #{tpu_custom_call.1} parent=1 // pred_check
      _
    $region11: #{tpu_custom_call.1} parent=1 // pred_check_branch
      %18 = sbr.rel (0) target = $region13
    $region12: #{tpu_custom_call.1} parent=1 // pred_region
      _
    $region13: #{tpu_custom_call.1} parent=1 // pred_fallthru
      _
    // Predicated region
    $region14: #{tpu_custom_call.1} parent=1 // pred_check
      _
    $region15: #{tpu_custom_call.1} parent=1 // pred_check_branch
      %20 = sbr.rel (0) target = $region17
    $region16: #{tpu_custom_call.1} parent=1 // pred_region
      _
    $region17: #{tpu_custom_call.1} parent=1 // pred_fallthru
      _
    // Predicated region
    $region18: #{tpu_custom_call.1} parent=1 // pred_check
      _
    $region19: #{tpu_custom_call.1} parent=1 // pred_check_branch
      %22 = sbr.rel (0) target = $region21
    $region20: #{tpu_custom_call.1} parent=1 // pred_region
      _
    $region21: #{tpu_custom_call.1} parent=1 // pred_fallthru
      _
    // Predicated region
    $region22: #{tpu_custom_call.1} parent=1 // pred_check
      _
    $region23: #{tpu_custom_call.1} parent=1 // pred_check_branch
      %24 = sbr.rel (0) target = $region25
    $region24: #{tpu_custom_call.1} parent=1 // pred_region
      _
    $region25: #{tpu_custom_call.1} parent=1 // pred_fallthru
      _
    // Predicated region
    $region26: #{tpu_custom_call.1} parent=1 // pred_check
      _
    $region27: #{tpu_custom_call.1} parent=1 // pred_check_branch
      %26 = sbr.rel (0) target = $region29
    $region28: #{tpu_custom_call.1} parent=1 // pred_region
      _
    $region29: #{tpu_custom_call.1} parent=1 // pred_fallthru
      _
    %v27 = vld [vmem:[%s0] sm:$0xf]
    %v28 = vld [vmem:[%s1] sm:$0xff]
    %v29 = vld [vmem:[%s1 + $0x8] sm:$0x3]
    %v30 = vld [vmem:[%s2] sm:$0xff]
    %v31 = vld [vmem:[%s2 + $0x8] sm:$0x3]
    %33 = vset.pattern.permute.xlu0 0
    %34 = vperm.xlu0 %33, %v30
    %v35 = vpop.permute.xlu0 %34
    %38 = vset.pattern.permute.xlu0 0
    %39 = vperm.xlu0 %38, %v31
    %v40 = vpop.permute.xlu0 %39
    %vm42 = vcmask 31744
    %v44 = vsel %vm42, %v28, 0
    %v47 = vsel %vm42, %v29, 0
    %vm49 = vcmask 1043456
    %v51 = vsel %vm49, %v27, 0
    %53 = vmatprep.subr.mxu0 0.0
    %54 = vmatpush1.msra.mxu0 0.0
    %55 = vmatprep.subr.mxu0 0.0
    %56 = vmatpush1.msra.mxu0 0.0
    %57 = vmatprep.subr.mxu0 0.0
    %58 = vmatpush1.msra.mxu0 0.0
    %59 = vmatprep.subr.mxu0 0.0
    %60 = vmatpush1.msra.mxu0 0.0
    %61 = vmatprep.subr.mxu0 0.0
    %62 = vmatpush1.msra.mxu0 0.0
    %63 = vmatprep.subr.mxu0 0.0
    %64 = vmatpush1.msra.mxu0 0.0
    %65 = vmatprep.subr.mxu0 0.0
    %66 = vmatpush1.msra.mxu0 0.0
    %67 = vmatprep.subr.mxu0 0.0
    %68 = vmatpush1.msra.mxu0 0.0
    %69 = vmatprep.subr.mxu0 0.0
    %70 = vmatpush1.msra.mxu0 0.0
    %71 = vmatprep.subr.mxu0 0.0
    %72 = vmatpush1.msra.mxu0 0.0
    %73 = vmatprep.subr.mxu0 0.0
    %74 = vmatpush1.msra.mxu0 0.0
    %75 = vmatprep.subr.mxu0 0.0
    %76 = vmatpush1.msra.mxu0 0.0
    %77 = vmatprep.subr.mxu0 0.0
    %78 = vmatpush1.msra.mxu0 0.0
    %79 = vmatprep.subr.mxu0 0.0
    %80 = vmatpush1.msra.mxu0 0.0
    %81 = vmatprep.subr.mxu0 0.0
    %82 = vmatpush1.msra.mxu0 0.0
    %83 = vmatprep.subr.mxu0 0.0
    %84 = vmatpush1.msra.mxu0 %v51
    %85 = vmatprep.subr.mxu0 0.0
    %86 = vmatpush2.msra.mxu0 0.0
    %87 = vmatprep.subr.mxu0 0.0
    %88 = vmatpush2.msra.mxu0 0.0
    %89 = vmatprep.subr.mxu0 0.0
    %90 = vmatpush2.msra.mxu0 0.0
    %91 = vmatprep.subr.mxu0 0.0
    %92 = vmatpush2.msra.mxu0 0.0
    %93 = vmatprep.subr.mxu0 0.0
    %94 = vmatpush2.msra.mxu0 0.0
    %95 = vmatprep.subr.mxu0 0.0
    %96 = vmatpush2.msra.mxu0 0.0
    %97 = vmatprep.subr.mxu0 0.0
    %98 = vmatpush2.msra.mxu0 0.0
    %99 = vmatprep.subr.mxu0 0.0
    %100 = vmatpush2.msra.mxu0 0.0
    %101 = vmatprep.subr.mxu0 0.0
    %102 = vmatpush2.msra.mxu0 0.0
    %103 = vmatprep.subr.mxu0 0.0
    %104 = vmatpush2.msra.mxu0 0.0
    %105 = vmatprep.subr.mxu0 0.0
    %106 = vmatpush2.msra.mxu0 0.0
    %107 = vmatprep.subr.mxu0 0.0
    %108 = vmatpush2.msra.mxu0 0.0
    %109 = vmatprep.subr.mxu0 0.0
    %110 = vmatpush2.msra.mxu0 0.0
    %111 = vmatprep.subr.mxu0 0.0
    %112 = vmatpush2.msra.mxu0 0.0
    %113 = vmatprep.subr.mxu0 0.0
    %114 = vmatpush2.msra.mxu0 0.0
    %115 = vmatprep.subr.mxu0 0.0
    %116 = vmatpush2.msra.mxu0 0.0
    %117 = vmatprep.mubr.f32.mxu0 0.0
    %118 = vmatmul.mubr.f32.gmra.mxu0 %v44
    %v119 = vpop.f32.mrf.mxu0
    %v120 = vadd.f32 %v35, %v119
    %v121 = vpop.f32.mrf.mxu0
    %122 = vmatprep.mubr.f32.mxu0 0.0
    %123 = vmatmul.mubr.f32.gmra.mxu0 %v47
    %v124 = vpop.f32.mrf.mxu0
    %v125 = vadd.f32 %v40, %v124
    %v126 = vpop.f32.mrf.mxu0
    %127 = vdwg.mxu0
    %v128 = vmax.f32 %v120, 0.0
    %v129 = vmax.f32 %v125, 0.0
    %v130 = vld [vmem:[%s3] sm:$0xff]
    %v131 = vld [vmem:[%s4] sm:$0xff]
    %133 = vset.pattern.permute.xlu0 0
    %134 = vperm.xlu0 %133, %v131
    %v135 = vpop.permute.xlu0 %134
    %vm137 = vcmask 80896
    %v139 = vsel %vm137, %v130, 0
    %vm141 = vcmask 1041408
    %v143 = vsel %vm141, %v129, 0
    %145 = vmatprep.subr.mxu0 0.0
    %146 = vmatpush1.msra.mxu0 0.0
    %147 = vmatprep.subr.mxu0 0.0
    %148 = vmatpush1.msra.mxu0 0.0
    %149 = vmatprep.subr.mxu0 0.0
    %150 = vmatpush1.msra.mxu0 0.0
    %151 = vmatprep.subr.mxu0 0.0
    %152 = vmatpush1.msra.mxu0 0.0
    %153 = vmatprep.subr.mxu0 0.0
    %154 = vmatpush1.msra.mxu0 0.0
    %155 = vmatprep.subr.mxu0 0.0
    %156 = vmatpush1.msra.mxu0 0.0
    %157 = vmatprep.subr.mxu0 0.0
    %158 = vmatpush1.msra.mxu0 0.0
    %159 = vmatprep.subr.mxu0 0.0
    %160 = vmatpush1.msra.mxu0 0.0
    %161 = vmatprep.subr.mxu0 0.0
    %162 = vmatpush1.msra.mxu0 0.0
    %163 = vmatprep.subr.mxu0 0.0
    %164 = vmatpush1.msra.mxu0 0.0
    %165 = vmatprep.subr.mxu0 0.0
    %166 = vmatpush1.msra.mxu0 0.0
    %167 = vmatprep.subr.mxu0 0.0
    %168 = vmatpush1.msra.mxu0 0.0
    %169 = vmatprep.subr.mxu0 0.0
    %170 = vmatpush1.msra.mxu0 0.0
    %171 = vmatprep.subr.mxu0 0.0
    %172 = vmatpush1.msra.mxu0 0.0
    %173 = vmatprep.subr.mxu0 0.0
    %174 = vmatpush1.msra.mxu0 %v143
    %175 = vmatprep.subr.mxu0 0.0
    %176 = vmatpush1.msra.mxu0 %v128
    %177 = vmatprep.subr.mxu0 0.0
    %178 = vmatpush2.msra.mxu0 0.0
    %179 = vmatprep.subr.mxu0 0.0
    %180 = vmatpush2.msra.mxu0 0.0
    %181 = vmatprep.subr.mxu0 0.0
    %182 = vmatpush2.msra.mxu0 0.0
    %183 = vmatprep.subr.mxu0 0.0
    %184 = vmatpush2.msra.mxu0 0.0
    %185 = vmatprep.subr.mxu0 0.0
    %186 = vmatpush2.msra.mxu0 0.0
    %187 = vmatprep.subr.mxu0 0.0
    %188 = vmatpush2.msra.mxu0 0.0
    %189 = vmatprep.subr.mxu0 0.0
    %190 = vmatpush2.msra.mxu0 0.0
    %191 = vmatprep.subr.mxu0 0.0
    %192 = vmatpush2.msra.mxu0 0.0
    %193 = vmatprep.subr.mxu0 0.0
    %194 = vmatpush2.msra.mxu0 0.0
    %195 = vmatprep.subr.mxu0 0.0
    %196 = vmatpush2.msra.mxu0 0.0
    %197 = vmatprep.subr.mxu0 0.0
    %198 = vmatpush2.msra.mxu0 0.0
    %199 = vmatprep.subr.mxu0 0.0
    %200 = vmatpush2.msra.mxu0 0.0
    %201 = vmatprep.subr.mxu0 0.0
    %202 = vmatpush2.msra.mxu0 0.0
    %203 = vmatprep.subr.mxu0 0.0
    %204 = vmatpush2.msra.mxu0 0.0
    %205 = vmatprep.subr.mxu0 0.0
    %206 = vmatpush2.msra.mxu0 0.0
    %207 = vmatprep.subr.mxu0 0.0
    %208 = vmatpush2.msra.mxu0 0.0
    %209 = vmatprep.mubr.f32.mxu0 0.0
    %210 = vmatmul.mubr.f32.gmra.mxu0 %v139
    %v211 = vpop.f32.mrf.mxu0
    %v212 = vadd.f32 %v135, %v211
    %v213 = vpop.f32.mrf.mxu0
    %214 = vdwg.mxu0
    %v215 = vmax.f32 %v212, 0.0
    %v216 = vld [vmem:[%s5] sm:$0x7]
    %v217 = vld [vmem:[%s6] sm:$0x7]
    %219 = vset.pattern.permute.xlu0 0
    %220 = vperm.xlu0 %219, %v217
    %v221 = vpop.permute.xlu0 %220
    %vm223 = vcmask 64512
    %v225 = vsel %vm223, %v216, 0
    %227 = vmatprep.subr.mxu0 0.0
    %228 = vmatpush1.msra.mxu0 0.0
    %229 = vmatprep.subr.mxu0 0.0
    %230 = vmatpush1.msra.mxu0 0.0
    %231 = vmatprep.subr.mxu0 0.0
    %232 = vmatpush1.msra.mxu0 0.0
    %233 = vmatprep.subr.mxu0 0.0
    %234 = vmatpush1.msra.mxu0 0.0
    %235 = vmatprep.subr.mxu0 0.0
    %236 = vmatpush1.msra.mxu0 0.0
    %237 = vmatprep.subr.mxu0 0.0
    %238 = vmatpush1.msra.mxu0 0.0
    %239 = vmatprep.subr.mxu0 0.0
    %240 = vmatpush1.msra.mxu0 0.0
    %241 = vmatprep.subr.mxu0 0.0
    %242 = vmatpush1.msra.mxu0 0.0
    %243 = vmatprep.subr.mxu0 0.0
    %244 = vmatpush1.msra.mxu0 0.0
    %245 = vmatprep.subr.mxu0 0.0
    %246 = vmatpush1.msra.mxu0 0.0
    %247 = vmatprep.subr.mxu0 0.0
    %248 = vmatpush1.msra.mxu0 0.0
    %249 = vmatprep.subr.mxu0 0.0
    %250 = vmatpush1.msra.mxu0 0.0
    %251 = vmatprep.subr.mxu0 0.0
    %252 = vmatpush1.msra.mxu0 0.0
    %253 = vmatprep.subr.mxu0 0.0
    %254 = vmatpush1.msra.mxu0 0.0
    %255 = vmatprep.subr.mxu0 0.0
    %256 = vmatpush1.msra.mxu0 0.0
    %257 = vmatprep.subr.mxu0 0.0
    %258 = vmatpush1.msra.mxu0 %v215
    %259 = vmatprep.subr.mxu0 0.0
    %260 = vmatpush2.msra.mxu0 0.0
    %261 = vmatprep.subr.mxu0 0.0
    %262 = vmatpush2.msra.mxu0 0.0
    %263 = vmatprep.subr.mxu0 0.0
    %264 = vmatpush2.msra.mxu0 0.0
    %265 = vmatprep.subr.mxu0 0.0
    %266 = vmatpush2.msra.mxu0 0.0
    %267 = vmatprep.subr.mxu0 0.0
    %268 = vmatpush2.msra.mxu0 0.0
    %269 = vmatprep.subr.mxu0 0.0
    %270 = vmatpush2.msra.mxu0 0.0
    %271 = vmatprep.subr.mxu0 0.0
    %272 = vmatpush2.msra.mxu0 0.0
    %273 = vmatprep.subr.mxu0 0.0
    %274 = vmatpush2.msra.mxu0 0.0
    %275 = vmatprep.subr.mxu0 0.0
    %276 = vmatpush2.msra.mxu0 0.0
    %277 = vmatprep.subr.mxu0 0.0
    %278 = vmatpush2.msra.mxu0 0.0
    %279 = vmatprep.subr.mxu0 0.0
    %280 = vmatpush2.msra.mxu0 0.0
    %281 = vmatprep.subr.mxu0 0.0
    %282 = vmatpush2.msra.mxu0 0.0
    %283 = vmatprep.subr.mxu0 0.0
    %284 = vmatpush2.msra.mxu0 0.0
    %285 = vmatprep.subr.mxu0 0.0
    %286 = vmatpush2.msra.mxu0 0.0
    %287 = vmatprep.subr.mxu0 0.0
    %288 = vmatpush2.msra.mxu0 0.0
    %289 = vmatprep.subr.mxu0 0.0
    %290 = vmatpush2.msra.mxu0 0.0
    %291 = vmatprep.mubr.f32.mxu0 0.0
    %292 = vmatmul.mubr.f32.gmra.mxu0 %v225
    %v293 = vpop.f32.mrf.mxu0
    %v294 = vadd.f32 %v221, %v293
    %v295 = vpop.f32.mrf.mxu0
    %296 = vdwg.mxu0
    %vm297 = vcmask 59392
    %298 = vst.msk [vmem:[#allocation2] sm:$0x7] %vm297, %v294
    // Predicated region
    $region30: #{tpu_custom_call.1} parent=1 // pred_check
      _
    $region31: #{tpu_custom_call.1} parent=1 // pred_check_branch
      %300 = sbr.rel (0) target = $region33
    $region32: #{tpu_custom_call.1} parent=1 // pred_region
      %s302 = ssub.s32 64, 64
      %303 = vsyncadd [#allocation3], %s302
      %s305 = sshll.u32 [#allocation2], 4
      %s306 = int_to_ptr.vmem [resolvable:$true] %s305
      %308 = dma.vmem_to_hbm [thread:$0]  %s306, 64, %s7, [#allocation3]
    $region33: #{tpu_custom_call.1} parent=1 // pred_fallthru
      _
    // Predicated region
    $region34: #{tpu_custom_call.1} parent=1 // pred_check
      _
    $region35: #{tpu_custom_call.1} parent=1 // pred_check_branch
      %310 = sbr.rel (0) target = $region37
    $region36: #{tpu_custom_call.1} parent=1 // pred_region
      %311 = dma.done [#allocation3], 64
    $region37: #{tpu_custom_call.1} parent=1 // pred_fallthru
      _
    %312 = vsyncpa [#allocation3], 1

</llo_original>
